<compile_context>
chip_gen: v7x
topology: tpu7x:2x2x1
jax: 0.10.0
libtpu: 0.0.40
codegen_flags: <defaults>
</compile_context>

<pallas_src>
import jax
import jax.numpy as jnp
from jax.experimental import pallas as pl
from jax.experimental.pallas import tpu as pltpu

BATCH, SEQ, HIDDEN, VOCAB, N_MLM = 2, 8, 32, 256, 4
NSP_PAD = 128  # lane-dense padded width for the 2-way NSP logits


# ------------------------------------------------------------------ kernel ---
def _bert_pretrain_kernel(ids_ref, seg_ref, mask_ref, mlmpos_ref,
                          emb_ref, w_ref, b_ref,
                          seq_ref, mlm_ref, nsp_ref):
    n_rows, h = seq_ref.shape            # (B*S, H)
    npos, v = mlm_ref.shape              # (B*n_mlm, vocab)
    b, nsp_pad = nsp_ref.shape           # (B, 128)
    s = n_rows // b                      # S
    n_mlm = npos // b

    # static column offsets into the fused weight / bias arrays
    o_bert, o_pool, o_nsp, o_mlm = 0, h, 2 * h, 2 * h + nsp_pad

    # --- embedding lookup: word one-hot matmul + segment select + position ---
    word_tab = emb_ref[0:v, :]                       # (V, H)
    seg0 = emb_ref[v:v + 1, :]                       # (1, H)
    seg1 = emb_ref[v + 1:v + 2, :]                   # (1, H)
    pos_tab = emb_ref[v + 8:v + 8 + s, :]            # (S, H)

    vcols = jax.lax.broadcasted_iota(jnp.int32, (n_rows, v), 1)
    word_oh = (vcols == ids_ref[...]).astype(jnp.float32)          # (B*S, V)
    emb = jnp.dot(word_oh, word_tab, preferred_element_type=jnp.float32)
    emb = emb + jnp.where(seg_ref[...] == 0, seg0, seg1)
    emb = emb + jnp.concatenate([pos_tab] * b, axis=0)

    # --- BERT stand-in encoder: dense + tanh, gated by input_mask -----------
    seq = jnp.tanh(
        jnp.dot(emb, w_ref[:, o_bert:o_bert + h],
                preferred_element_type=jnp.float32)
        + b_ref[:, o_bert:o_bert + h]) * mask_ref[...].astype(jnp.float32)
    seq_ref[...] = seq
    # TODO(synk): at real sizes store a lane-dense (B, S*H) sequence_output;
    # at H=32 the masked partial store is negligible.

    # --- MLM head: global positions, one-hot gather via MXU, then linear ----
    rowidx = jax.lax.broadcasted_iota(jnp.int32, (npos, 1), 0)
    offset = jnp.zeros((npos, 1), jnp.int32)
    for j in range(1, b):   # static unroll == (rowidx // n_mlm) * s, no int div
        offset = offset + jnp.where(rowidx >= j * n_mlm, s, 0).astype(jnp.int32)
    gpos = mlmpos_ref[...] + offset                                # (npos, 1)
    gcols = jax.lax.broadcasted_iota(jnp.int32, (npos, n_rows), 1)
    onehot = (gcols == gpos).astype(jnp.float32)   # OOB position -> zero row
    gathered = jnp.dot(onehot, seq, preferred_element_type=jnp.float32)
    mlm_ref[...] = (jnp.dot(gathered, w_ref[:, o_mlm:o_mlm + v],
                            preferred_element_type=jnp.float32)
                    + b_ref[:, o_mlm:o_mlm + v])

    # --- NSP head: [CLS] rows via static slices, pooler + classifier --------
    cls = jnp.concatenate([seq[i * s:i * s + 1, :] for i in range(b)], axis=0)
    pooled = jnp.tanh(
        jnp.dot(cls, w_ref[:, o_pool:o_pool + h],
                preferred_element_type=jnp.float32)
        + b_ref[:, o_pool:o_pool + h])
    # lane-dense (B, 128) store; wrapper slices the first 2 columns
    nsp_ref[...] = (jnp.dot(pooled, w_ref[:, o_nsp:o_nsp + nsp_pad],
                            preferred_element_type=jnp.float32)
                    + b_ref[:, o_nsp:o_nsp + nsp_pad])


# ----------------------------------------------------------------- wrapper ---
@jax.jit
def _forward(input_ids, input_mask, segment_ids, mlm_positions,
             emb_tab, w_all, b_all):
    B, S = input_ids.shape
    H = emb_tab.shape[1]
    V = w_all.shape[1] - 2 * H - NSP_PAD
    npos = B * mlm_positions.shape[1]

    # host-side reshapes of contiguous int arrays are metadata-only bitcasts
    ids_col = input_ids.reshape(B * S, 1).astype(jnp.int32)
    seg_col = segment_ids.reshape(B * S, 1).astype(jnp.int32)
    mask_col = input_mask.reshape(B * S, 1).astype(jnp.int32)
    mlmpos_col = mlm_positions.reshape(npos, 1).astype(jnp.int32)

    vmem = pl.BlockSpec(memory_space=pltpu.MemorySpace.VMEM)
    seq, mlm, nsp_pad = pl.pallas_call(
        _bert_pretrain_kernel,
        out_shape=(jax.ShapeDtypeStruct((B * S, H), jnp.float32),
                   jax.ShapeDtypeStruct((npos, V), jnp.float32),
                   jax.ShapeDtypeStruct((B, NSP_PAD), jnp.float32)),
        in_specs=[vmem] * 7,
        out_specs=(vmem, vmem, vmem),
    )(ids_col, seg_col, mask_col, mlmpos_col, emb_tab, w_all, b_all)
    return seq.reshape(B, S, H), mlm, nsp_pad[:, :2]


def bert_pretrain_forward(mini_batch, params):
    seq, mlm, nsp = _forward(
        mini_batch["input_ids"], mini_batch["input_mask"],
        mini_batch["segment_ids"], mini_batch["mlm_positions"],
        params["emb_tab"], params["w_all"], params["b_all"])
    # preserve the module's side-effect of stashing sequence_output
    mini_batch["sequence_output"] = seq
    return mlm, nsp


def init_params(key):
    ks = jax.random.split(key, 11)
    f = lambda k, s: (0.02 * jax.random.normal(k, s)).astype(jnp.float32)
    p = dict(
        word_emb=f(ks[0], (VOCAB, HIDDEN)),
        seg_emb=f(ks[1], (2, HIDDEN)),
        pos_emb=f(ks[2], (SEQ, HIDDEN)),
        bert_w=f(ks[3], (HIDDEN, HIDDEN)),
        bert_b=f(ks[4], (1, HIDDEN)),
        mlm_w=f(ks[5], (HIDDEN, VOCAB)),
        mlm_b=f(ks[6], (1, VOCAB)),
        pool_w=f(ks[7], (HIDDEN, HIDDEN)),
        pool_b=f(ks[8], (1, HIDDEN)),
        nsp_w=f(ks[9], (HIDDEN, 2)),
        nsp_b=f(ks[10], (1, 2)),
    )
    # --- hoisted, consolidated kernel operands (built ONCE, not per step) ---
    H, V, S = HIDDEN, VOCAB, SEQ
    emb_tab = jnp.zeros((V + 8 + S, H), jnp.float32)
    emb_tab = (emb_tab.at[:V].set(p["word_emb"])
                      .at[V:V + 2].set(p["seg_emb"])
                      .at[V + 8:V + 8 + S].set(p["pos_emb"]))
    w_all = jnp.zeros((H, 2 * H + NSP_PAD + V), jnp.float32)
    w_all = (w_all.at[:, :H].set(p["bert_w"])
                  .at[:, H:2 * H].set(p["pool_w"])
                  .at[:, 2 * H:2 * H + 2].set(p["nsp_w"])
                  .at[:, 2 * H + NSP_PAD:].set(p["mlm_w"]))
    b_all = jnp.zeros((1, 2 * H + NSP_PAD + V), jnp.float32)
    b_all = (b_all.at[:, :H].set(p["bert_b"])
                  .at[:, H:2 * H].set(p["pool_b"])
                  .at[:, 2 * H:2 * H + 2].set(p["nsp_b"])
                  .at[:, 2 * H + NSP_PAD:].set(p["mlm_b"]))
    p.update(emb_tab=emb_tab, w_all=w_all, b_all=b_all)
    return p


if __name__ == "__main__":
    key = jax.random.PRNGKey(0)
    kp, k1, k2, k3 = jax.random.split(key, 4)
    params = init_params(kp)

    input_ids = jax.random.randint(k1, (BATCH, SEQ), 0, VOCAB, dtype=jnp.int32)
    segment_ids = jax.random.randint(k2, (BATCH, SEQ), 0, 2, dtype=jnp.int32)
    input_mask = jnp.ones((BATCH, SEQ), jnp.int32)
    mlm_positions = jax.random.randint(k3, (BATCH, N_MLM), 0, SEQ, dtype=jnp.int32)

    mini_batch = dict(input_ids=input_ids, input_mask=input_mask,
                      segment_ids=segment_ids, mlm_positions=mlm_positions)

    mlm_scores, nsp_scores = jax.block_until_ready(
        bert_pretrain_forward(mini_batch, params))

    # pure-JAX reference check of the full forward (uses the unfused params)
    emb = (params["word_emb"][input_ids] + params["seg_emb"][segment_ids]
           + params["pos_emb"][None])
    seq = (jnp.tanh(emb @ params["bert_w"] + params["bert_b"][0])
           * input_mask[..., None].astype(jnp.float32))
    flat = seq.reshape(-1, HIDDEN)
    gpos = (mlm_positions + jnp.arange(BATCH)[:, None] * SEQ).reshape(-1)
    mlm_ref = flat[gpos] @ params["mlm_w"] + params["mlm_b"][0]
    pooled = jnp.tanh(seq[:, 0, :] @ params["pool_w"] + params["pool_b"][0])
    nsp_ref = pooled @ params["nsp_w"] + params["nsp_b"][0]

    assert mlm_scores.shape == (BATCH * N_MLM, VOCAB)
    assert nsp_scores.shape == (BATCH, 2)
    assert jnp.allclose(mlm_scores, mlm_ref, atol=1e-4), "MLM mismatch"
    assert jnp.allclose(nsp_scores, nsp_ref, atol=1e-4), "NSP mismatch"
    assert jnp.allclose(mini_batch["sequence_output"], seq, atol=1e-4), "seq mismatch"
    print("KERNEL_OK")
</pallas_src>

<mosaic_0001>
module attributes {stable_mosaic.version = 11 : i64} {
  func.func @_bert_pretrain_kernel(%arg0: memref<16x1xi32, #tpu.memory_space<vmem>>, %arg1: memref<16x1xi32, #tpu.memory_space<vmem>>, %arg2: memref<16x1xi32, #tpu.memory_space<vmem>>, %arg3: memref<8x1xi32, #tpu.memory_space<vmem>>, %arg4: memref<272x32xf32, #tpu.memory_space<vmem>>, %arg5: memref<32x448xf32, #tpu.memory_space<vmem>>, %arg6: memref<1x448xf32, #tpu.memory_space<vmem>>, %arg7: memref<16x32xf32, #tpu.memory_space<vmem>>, %arg8: memref<8x256xf32, #tpu.memory_space<vmem>>, %arg9: memref<2x128xf32, #tpu.memory_space<vmem>>) attributes {dimension_semantics = [], scalar_prefetch = 0 : i64, scratch_operands = 0 : i64, tpu.core_type = #tpu.core_type<tc>} {
    %c0 = arith.constant 0 : index
    %c0_0 = arith.constant 0 : index
    %0 = vector.load %arg4[%c0, %c0_0] : memref<272x32xf32, #tpu.memory_space<vmem>>, vector<256x32xf32>
    %c256 = arith.constant 256 : index
    %c0_1 = arith.constant 0 : index
    %1 = vector.load %arg4[%c256, %c0_1] : memref<272x32xf32, #tpu.memory_space<vmem>>, vector<1x32xf32>
    %c257 = arith.constant 257 : index
    %c0_2 = arith.constant 0 : index
    %2 = vector.load %arg4[%c257, %c0_2] : memref<272x32xf32, #tpu.memory_space<vmem>>, vector<1x32xf32>
    %c264 = arith.constant 264 : index
    %c0_3 = arith.constant 0 : index
    %3 = vector.load %arg4[%c264, %c0_3] : memref<272x32xf32, #tpu.memory_space<vmem>>, vector<8x32xf32>
    %4 = tpu.iota {dimensions = array<i32: 1>} : vector<16x256xi32>
    %c0_4 = arith.constant 0 : index
    %c0_5 = arith.constant 0 : index
    %5 = vector.load %arg0[%c0_4, %c0_5] : memref<16x1xi32, #tpu.memory_space<vmem>>, vector<16x1xi32>
    %6 = vector.broadcast %5 : vector<16x1xi32> to vector<16x256xi32>
    %7 = arith.cmpi eq, %4, %6 : vector<16x256xi32>
    %8 = arith.extui %7 : vector<16x256xi1> to vector<16x256xi32>
    %9 = arith.sitofp %8 : vector<16x256xi32> to vector<16x256xf32>
    %cst = arith.constant dense<0.000000e+00> : vector<16x32xf32>
    %10 = tpu.matmul %9, %0, %cst {dimension_numbers = #tpu.dot_dimension_numbers<[1], [0], [0], [1], [0, 0, 1, 1], [], []>} : vector<16x256xf32>, vector<256x32xf32>, vector<16x32xf32> -> vector<16x32xf32>
    %c0_6 = arith.constant 0 : index
    %c0_7 = arith.constant 0 : index
    %11 = vector.load %arg1[%c0_6, %c0_7] : memref<16x1xi32, #tpu.memory_space<vmem>>, vector<16x1xi32>
    %c0_i32 = arith.constant 0 : i32
    %12 = vector.broadcast %c0_i32 : i32 to vector<16x1xi32>
    %13 = arith.cmpi eq, %11, %12 : vector<16x1xi32>
    %14 = vector.shape_cast %13 : vector<16x1xi1> to vector<16x1xi1>
    %15 = vector.broadcast %14 : vector<16x1xi1> to vector<16x32xi1>
    %16 = vector.shape_cast %1 : vector<1x32xf32> to vector<1x32xf32>
    %17 = vector.broadcast %16 : vector<1x32xf32> to vector<16x32xf32>
    %18 = vector.shape_cast %2 : vector<1x32xf32> to vector<1x32xf32>
    %19 = vector.broadcast %18 : vector<1x32xf32> to vector<16x32xf32>
    %20 = arith.select %15, %17, %19 : vector<16x32xi1>, vector<16x32xf32>
    %21 = arith.addf %10, %20 : vector<16x32xf32>
    %22 = tpu.concatenate %3, %3 in 0 : vector<8x32xf32>, vector<8x32xf32> -> vector<16x32xf32>
    %23 = arith.addf %21, %22 : vector<16x32xf32>
    %c0_8 = arith.constant 0 : index
    %c0_9 = arith.constant 0 : index
    %24 = vector.load %arg5[%c0_8, %c0_9] : memref<32x448xf32, #tpu.memory_space<vmem>>, vector<32x32xf32>
    %cst_10 = arith.constant dense<0.000000e+00> : vector<16x32xf32>
    %25 = tpu.matmul %23, %24, %cst_10 {dimension_numbers = #tpu.dot_dimension_numbers<[1], [0], [0], [1], [0, 0, 1, 1], [], []>} : vector<16x32xf32>, vector<32x32xf32>, vector<16x32xf32> -> vector<16x32xf32>
    %c0_11 = arith.constant 0 : index
    %c0_12 = arith.constant 0 : index
    %26 = vector.load %arg6[%c0_11, %c0_12] : memref<1x448xf32, #tpu.memory_space<vmem>>, vector<1x32xf32>
    %27 = vector.broadcast %26 : vector<1x32xf32> to vector<16x32xf32>
    %28 = arith.addf %25, %27 : vector<16x32xf32>
    %29 = math.tanh %28 : vector<16x32xf32>
    %c0_13 = arith.constant 0 : index
    %c0_14 = arith.constant 0 : index
    %30 = vector.load %arg2[%c0_13, %c0_14] : memref<16x1xi32, #tpu.memory_space<vmem>>, vector<16x1xi32>
    %31 = arith.sitofp %30 : vector<16x1xi32> to vector<16x1xf32>
    %32 = vector.broadcast %31 : vector<16x1xf32> to vector<16x32xf32>
    %33 = arith.mulf %29, %32 : vector<16x32xf32>
    %c0_15 = arith.constant 0 : index
    %c0_16 = arith.constant 0 : index
    %34 = vector.load %arg7[%c0_15, %c0_16] : memref<16x32xf32, #tpu.memory_space<vmem>>, vector<16x32xf32>
    tpu.vector_store %arg7[%c0_15, %c0_16], %33 {strides = array<i32>} : memref<16x32xf32, #tpu.memory_space<vmem>>, vector<16x32xf32>,
    %35 = tpu.iota {dimensions = array<i32: 0>} : vector<8x1xi32>
    %c0_i32_17 = arith.constant 0 : i32
    %36 = vector.broadcast %c0_i32_17 : i32 to vector<8x1xi32>
    %c4_i32 = arith.constant 4 : i32
    %37 = vector.broadcast %c4_i32 : i32 to vector<8x1xi32>
    %38 = arith.cmpi sge, %35, %37 : vector<8x1xi32>
    %c8_i32 = arith.constant 8 : i32
    %c0_i32_18 = arith.constant 0 : i32
    %39 = vector.broadcast %c8_i32 : i32 to vector<8x1xi32>
    %40 = vector.broadcast %c0_i32_18 : i32 to vector<8x1xi32>
    %41 = arith.select %38, %39, %40 : vector<8x1xi1>, vector<8x1xi32>
    %42 = arith.addi %36, %41 : vector<8x1xi32>
    %c0_19 = arith.constant 0 : index
    %c0_20 = arith.constant 0 : index
    %43 = vector.load %arg3[%c0_19, %c0_20] : memref<8x1xi32, #tpu.memory_space<vmem>>, vector<8x1xi32>
    %44 = arith.addi %43, %42 : vector<8x1xi32>
    %45 = tpu.iota {dimensions = array<i32: 1>} : vector<8x16xi32>
    %46 = vector.broadcast %44 : vector<8x1xi32> to vector<8x16xi32>
    %47 = arith.cmpi eq, %45, %46 : vector<8x16xi32>
    %48 = arith.extui %47 : vector<8x16xi1> to vector<8x16xi32>
    %49 = arith.sitofp %48 : vector<8x16xi32> to vector<8x16xf32>
    %cst_21 = arith.constant dense<0.000000e+00> : vector<8x32xf32>
    %50 = tpu.matmul %49, %33, %cst_21 {dimension_numbers = #tpu.dot_dimension_numbers<[1], [0], [0], [1], [0, 0, 1, 1], [], []>} : vector<8x16xf32>, vector<16x32xf32>, vector<8x32xf32> -> vector<8x32xf32>
    %c0_22 = arith.constant 0 : index
    %c192 = arith.constant 192 : index
    %51 = vector.load %arg5[%c0_22, %c192] : memref<32x448xf32, #tpu.memory_space<vmem>>, vector<32x256xf32>
    %cst_23 = arith.constant dense<0.000000e+00> : vector<8x256xf32>
    %52 = tpu.matmul %50, %51, %cst_23 {dimension_numbers = #tpu.dot_dimension_numbers<[1], [0], [0], [1], [0, 0, 1, 1], [], []>} : vector<8x32xf32>, vector<32x256xf32>, vector<8x256xf32> -> vector<8x256xf32>
    %c0_24 = arith.constant 0 : index
    %c192_25 = arith.constant 192 : index
    %53 = vector.load %arg6[%c0_24, %c192_25] : memref<1x448xf32, #tpu.memory_space<vmem>>, vector<1x256xf32>
    %54 = vector.broadcast %53 : vector<1x256xf32> to vector<8x256xf32>
    %55 = arith.addf %52, %54 : vector<8x256xf32>
    %c0_26 = arith.constant 0 : index
    %c0_27 = arith.constant 0 : index
    %56 = vector.load %arg8[%c0_26, %c0_27] : memref<8x256xf32, #tpu.memory_space<vmem>>, vector<8x256xf32>
    tpu.vector_store %arg8[%c0_26, %c0_27], %55 {strides = array<i32>} : memref<8x256xf32, #tpu.memory_space<vmem>>, vector<8x256xf32>,
    %57 = vector.extract_strided_slice %33 {offsets = [0, 0], sizes = [1, 32], strides = [1, 1]} : vector<16x32xf32> to vector<1x32xf32>
    %58 = vector.extract_strided_slice %33 {offsets = [8, 0], sizes = [1, 32], strides = [1, 1]} : vector<16x32xf32> to vector<1x32xf32>
    %59 = tpu.concatenate %57, %58 in 0 : vector<1x32xf32>, vector<1x32xf32> -> vector<2x32xf32>
    %c0_28 = arith.constant 0 : index
    %c32 = arith.constant 32 : index
    %60 = vector.load %arg5[%c0_28, %c32] : memref<32x448xf32, #tpu.memory_space<vmem>>, vector<32x32xf32>
    %cst_29 = arith.constant dense<0.000000e+00> : vector<2x32xf32>
    %61 = tpu.matmul %59, %60, %cst_29 {dimension_numbers = #tpu.dot_dimension_numbers<[1], [0], [0], [1], [0, 0, 1, 1], [], []>} : vector<2x32xf32>, vector<32x32xf32>, vector<2x32xf32> -> vector<2x32xf32>
    %c0_30 = arith.constant 0 : index
    %c32_31 = arith.constant 32 : index
    %62 = vector.load %arg6[%c0_30, %c32_31] : memref<1x448xf32, #tpu.memory_space<vmem>>, vector<1x32xf32>
    %63 = vector.broadcast %62 : vector<1x32xf32> to vector<2x32xf32>
    %64 = arith.addf %61, %63 : vector<2x32xf32>
    %65 = math.tanh %64 : vector<2x32xf32>
    %c0_32 = arith.constant 0 : index
    %c64 = arith.constant 64 : index
    %66 = vector.load %arg5[%c0_32, %c64] : memref<32x448xf32, #tpu.memory_space<vmem>>, vector<32x128xf32>
    %cst_33 = arith.constant dense<0.000000e+00> : vector<2x128xf32>
    %67 = tpu.matmul %65, %66, %cst_33 {dimension_numbers = #tpu.dot_dimension_numbers<[1], [0], [0], [1], [0, 0, 1, 1], [], []>} : vector<2x32xf32>, vector<32x128xf32>, vector<2x128xf32> -> vector<2x128xf32>
    %c0_34 = arith.constant 0 : index
    %c64_35 = arith.constant 64 : index
    %68 = vector.load %arg6[%c0_34, %c64_35] : memref<1x448xf32, #tpu.memory_space<vmem>>, vector<1x128xf32>
    %69 = vector.broadcast %68 : vector<1x128xf32> to vector<2x128xf32>
    %70 = arith.addf %67, %69 : vector<2x128xf32>
    %c0_36 = arith.constant 0 : index
    %c0_37 = arith.constant 0 : index
    %71 = vector.load %arg9[%c0_36, %c0_37] : memref<2x128xf32, #tpu.memory_space<vmem>>, vector<2x128xf32>
    tpu.vector_store %arg9[%c0_36, %c0_37], %70 {strides = array<i32>} : memref<2x128xf32, #tpu.memory_space<vmem>>, vector<2x128xf32>,
    return
  }
}

</mosaic_0001>

<llo_original>
// kernel: _forward.1
$region0: #{_forward.1}
  #allocation0 [shape = 'u32[]', space=smem, size = 0x4, offset = 0x4, fixed_abs, tag = 'smem constant byte address 0x4 - core index']
  #allocation1 [shape = 'u32[144,128]{1,0:T(1,128)}', space=vmem, size = 0x12000, scoped, tag = 'internal scratch']
  %s0 = inlined_call_operand.vmem [shape: s32[16,1], index: 0, kind: input, shape index: {}]
  %s1 = inlined_call_operand.vmem [shape: s32[16,1], index: 1, kind: input, shape index: {}]
  %s2 = inlined_call_operand.vmem [shape: s32[16,1], index: 2, kind: input, shape index: {}]
  %s3 = inlined_call_operand.vmem [shape: s32[8,1], index: 3, kind: input, shape index: {}]
  %s4 = inlined_call_operand.vmem [shape: f32[272,32], index: 4, kind: input, shape index: {}]
  %s5 = inlined_call_operand.vmem [shape: f32[32,448], index: 5, kind: input, shape index: {}]
  %s6 = inlined_call_operand.vmem [shape: f32[1,448], index: 6, kind: input, shape index: {}]
  %s7 = inlined_call_operand.hbm [shape: f32[16,32], index: 7, kind: output, shape index: {0}]
  %s8 = inlined_call_operand.hbm [shape: f32[8,256], index: 8, kind: output, shape index: {1}]
  %s9 = inlined_call_operand.hbm [shape: f32[2,128], index: 9, kind: output, shape index: {2}]
  %10 = xla_tuple %s7, %s8, %s9
  %s11 = sld [smem:[#allocation0]]
  $region54: #{_forward.1} parent=0
    _
  %s13 = ssub.s32 1, %s11
  %s14 = scalar_select 0, %s13, %s11
  $region1: #{_forward.1} parent=0
    #allocation2 [shape = 'u8[8192]{0}', space=vmem, size = 0x2000, scoped, tag = 'output window, operand 0, single buffered']
    #allocation3 [shape = 's32[1]{0}', space=sflag, size = 0x4, scoped, tag = 'scoped memory for _forward.1']
    #allocation4 [shape = 'u8[8192]{0}', space=vmem, size = 0x2000, scoped, tag = 'output window, operand 1, single buffered']
    #allocation5 [shape = 's32[1]{0}', space=sflag, size = 0x4, scoped, tag = 'scoped memory for _forward.1']
    #allocation6 [shape = 'u8[1024]{0}', space=vmem, size = 0x400, scoped, tag = 'output window, operand 2, single buffered']
    %15 = vsyncpa [#allocation3], 0
    %16 = vsyncpa [#allocation5], 0
    // Predicated region
    $region2: #{_forward.1} parent=1 // pred_check
      _
    $region3: #{_forward.1} parent=1 // pred_check_branch
      %18 = sbr.rel (0) target = $region5
    $region4: #{_forward.1} parent=1 // pred_region
      _
    $region5: #{_forward.1} parent=1 // pred_fallthru
      _
    // Predicated region
    $region6: #{_forward.1} parent=1 // pred_check
      _
    $region7: #{_forward.1} parent=1 // pred_check_branch
      %20 = sbr.rel (0) target = $region9
    $region8: #{_forward.1} parent=1 // pred_region
      _
    $region9: #{_forward.1} parent=1 // pred_fallthru
      _
    // Predicated region
    $region10: #{_forward.1} parent=1 // pred_check
      _
    $region11: #{_forward.1} parent=1 // pred_check_branch
      %22 = sbr.rel (0) target = $region13
    $region12: #{_forward.1} parent=1 // pred_region
      _
    $region13: #{_forward.1} parent=1 // pred_fallthru
      _
    // Predicated region
    $region14: #{_forward.1} parent=1 // pred_check
      _
    $region15: #{_forward.1} parent=1 // pred_check_branch
      %24 = sbr.rel (0) target = $region17
    $region16: #{_forward.1} parent=1 // pred_region
      _
    $region17: #{_forward.1} parent=1 // pred_fallthru
      _
    // Predicated region
    $region18: #{_forward.1} parent=1 // pred_check
      _
    $region19: #{_forward.1} parent=1 // pred_check_branch
      %26 = sbr.rel (0) target = $region21
    $region20: #{_forward.1} parent=1 // pred_region
      _
    $region21: #{_forward.1} parent=1 // pred_fallthru
      _
    // Predicated region
    $region22: #{_forward.1} parent=1 // pred_check
      _
    $region23: #{_forward.1} parent=1 // pred_check_branch
      %28 = sbr.rel (0) target = $region25
    $region24: #{_forward.1} parent=1 // pred_region
      _
    $region25: #{_forward.1} parent=1 // pred_fallthru
      _
    // Predicated region
    $region26: #{_forward.1} parent=1 // pred_check
      _
    $region27: #{_forward.1} parent=1 // pred_check_branch
      %30 = sbr.rel (0) target = $region29
    $region28: #{_forward.1} parent=1 // pred_region
      _
    $region29: #{_forward.1} parent=1 // pred_fallthru
      _
    %v31 = vld [vmem:[%s4] sm:$0xff]
    %v32 = vld [vmem:[%s4 + $0x8] sm:$0xff]
    %v33 = vld [vmem:[%s4 + $0x10] sm:$0xff]
    %v34 = vld [vmem:[%s4 + $0x18] sm:$0xff]
    %v35 = vld [vmem:[%s4 + $0x20] sm:$0xff]
    %v36 = vld [vmem:[%s4 + $0x28] sm:$0xff]
    %v37 = vld [vmem:[%s4 + $0x30] sm:$0xff]
    %v38 = vld [vmem:[%s4 + $0x38] sm:$0xff]
    %v39 = vld [vmem:[%s4 + $0x40] sm:$0xff]
    %v40 = vld [vmem:[%s4 + $0x48] sm:$0xff]
    %v41 = vld [vmem:[%s4 + $0x50] sm:$0xff]
    %v42 = vld [vmem:[%s4 + $0x58] sm:$0xff]
    %v43 = vld [vmem:[%s4 + $0x60] sm:$0xff]
    %v44 = vld [vmem:[%s4 + $0x68] sm:$0xff]
    %v45 = vld [vmem:[%s4 + $0x70] sm:$0xff]
    %v46 = vld [vmem:[%s4 + $0x78] sm:$0xff]
    %v47 = vld [vmem:[%s4 + $0x80] sm:$0xff]
    %v48 = vld [vmem:[%s4 + $0x88] sm:$0xff]
    %v49 = vld [vmem:[%s4 + $0x90] sm:$0xff]
    %v50 = vld [vmem:[%s4 + $0x98] sm:$0xff]
    %v51 = vld [vmem:[%s4 + $0xa0] sm:$0xff]
    %v52 = vld [vmem:[%s4 + $0xa8] sm:$0xff]
    %v53 = vld [vmem:[%s4 + $0xb0] sm:$0xff]
    %v54 = vld [vmem:[%s4 + $0xb8] sm:$0xff]
    %v55 = vld [vmem:[%s4 + $0xc0] sm:$0xff]
    %v56 = vld [vmem:[%s4 + $0xc8] sm:$0xff]
    %v57 = vld [vmem:[%s4 + $0xd0] sm:$0xff]
    %v58 = vld [vmem:[%s4 + $0xd8] sm:$0xff]
    %v59 = vld [vmem:[%s4 + $0xe0] sm:$0xff]
    %v60 = vld [vmem:[%s4 + $0xe8] sm:$0xff]
    %v61 = vld [vmem:[%s4 + $0xf0] sm:$0xff]
    %v62 = vld [vmem:[%s4 + $0xf8] sm:$0xff]
    %v63 = vld [vmem:[%s4 + $0x100] sm:$0x1]
    %v64 = vld [vmem:[%s4 + $0x101] sm:$0x1]
    %v65 = vld [vmem:[%s4 + $0x108] sm:$0xff]
    %v66 = vlaneseq
    %v67 = vand.u32 %v66, 127
    %v68 = vadd.s32 %v67, 128
    %v69 = vld [vmem:[%s0] sm:$0xff]
    %v70 = vld [vmem:[%s0 + $0x8] sm:$0xff]
    %71 = vset.pattern.permute.xlu0 0
    %72 = vperm.xlu0 %71, %v69
    %v73 = vpop.permute.xlu0 %72
    %74 = vset.pattern.permute.xlu0 0
    %75 = vperm.xlu0 %74, %v70
    %v76 = vpop.permute.xlu0 %75
    %vm77 = vcmp.eq.s32.totalorder %v67, %v73
    %vm78 = vcmp.eq.s32.totalorder %v68, %v73
    %vm79 = vcmp.eq.s32.totalorder %v67, %v76
    %vm80 = vcmp.eq.s32.totalorder %v68, %v76
    %v81 = vsel %vm77, 1, 0
    %v82 = vsel %vm78, 1, 0
    %v83 = vsel %vm79, 1, 0
    %v84 = vsel %vm80, 1, 0
    %v85 = vcvt.s32.f32 %v81
    %v86 = vcvt.s32.f32 %v82
    %v87 = vcvt.s32.f32 %v83
    %v88 = vcvt.s32.f32 %v84
    %v89 = vld [vmem:[%s1] sm:$0xff]
    %v90 = vld [vmem:[%s1 + $0x8] sm:$0xff]
    %vm91 = vcmp.eq.s32.totalorder %v89, 0
    %vm92 = vcmp.eq.s32.totalorder %v90, 0
    %v93 = vsel %vm91, 1, 0
    %v94 = vsel %vm92, 1, 0
    %95 = vset.pattern.permute.xlu0 0
    %96 = vperm.xlu0 %95, %v93
    %v97 = vpop.permute.xlu0 %96
    %98 = vset.pattern.permute.xlu0 0
    %99 = vperm.xlu0 %98, %v94
    %v100 = vpop.permute.xlu0 %99
    %vm101 = vcmp.eq.s32.totalorder %v97, 1
    %vm102 = vcmp.eq.s32.totalorder %v100, 1
    %v103 = vlaneseq
    %v104 = vshrl.u32 %v103, 7
    %v105 = vsub.s32 0, %v104
    %v106 = vrot.slane %v63, %v105
    %v107 = vlaneseq
    %v108 = vshrl.u32 %v107, 7
    %v109 = vsub.s32 0, %v108
    %v110 = vrot.slane %v64, %v109
    %v111 = vsel %vm101, %v106, %v110
    %v112 = vsel %vm102, %v106, %v110
    %113 = vmatprep.subr.mxu0 0.0
    %114 = vmatpush1.msra.mxu0 %v31
    %115 = vmatprep.subr.mxu0 0.0
    %116 = vmatpush1.msra.mxu0 %v32
    %117 = vmatprep.subr.mxu0 0.0
    %118 = vmatpush1.msra.mxu0 %v33
    %119 = vmatprep.subr.mxu0 0.0
    %120 = vmatpush1.msra.mxu0 %v34
    %121 = vmatprep.subr.mxu0 0.0
    %122 = vmatpush1.msra.mxu0 %v35
    %123 = vmatprep.subr.mxu0 0.0
    %124 = vmatpush1.msra.mxu0 %v36
    %125 = vmatprep.subr.mxu0 0.0
    %126 = vmatpush1.msra.mxu0 %v37
    %127 = vmatprep.subr.mxu0 0.0
    %128 = vmatpush1.msra.mxu0 %v38
    %129 = vmatprep.subr.mxu0 0.0
    %130 = vmatpush1.msra.mxu0 %v39
    %131 = vmatprep.subr.mxu0 0.0
    %132 = vmatpush1.msra.mxu0 %v40
    %133 = vmatprep.subr.mxu0 0.0
    %134 = vmatpush1.msra.mxu0 %v41
    %135 = vmatprep.subr.mxu0 0.0
    %136 = vmatpush1.msra.mxu0 %v42
    %137 = vmatprep.subr.mxu0 0.0
    %138 = vmatpush1.msra.mxu0 %v43
    %139 = vmatprep.subr.mxu0 0.0
    %140 = vmatpush1.msra.mxu0 %v44
    %141 = vmatprep.subr.mxu0 0.0
    %142 = vmatpush1.msra.mxu0 %v45
    %143 = vmatprep.subr.mxu0 0.0
    %144 = vmatpush1.msra.mxu0 %v46
    %145 = vmatprep.subr.mxu0 0.0
    %146 = vmatpush1.msra.mxu0 %v47
    %147 = vmatprep.subr.mxu0 0.0
    %148 = vmatpush1.msra.mxu0 %v48
    %149 = vmatprep.subr.mxu0 0.0
    %150 = vmatpush1.msra.mxu0 %v49
    %151 = vmatprep.subr.mxu0 0.0
    %152 = vmatpush1.msra.mxu0 %v50
    %153 = vmatprep.subr.mxu0 0.0
    %154 = vmatpush1.msra.mxu0 %v51
    %155 = vmatprep.subr.mxu0 0.0
    %156 = vmatpush1.msra.mxu0 %v52
    %157 = vmatprep.subr.mxu0 0.0
    %158 = vmatpush1.msra.mxu0 %v53
    %159 = vmatprep.subr.mxu0 0.0
    %160 = vmatpush1.msra.mxu0 %v54
    %161 = vmatprep.subr.mxu0 0.0
    %162 = vmatpush1.msra.mxu0 %v55
    %163 = vmatprep.subr.mxu0 0.0
    %164 = vmatpush1.msra.mxu0 %v56
    %165 = vmatprep.subr.mxu0 0.0
    %166 = vmatpush1.msra.mxu0 %v57
    %167 = vmatprep.subr.mxu0 0.0
    %168 = vmatpush1.msra.mxu0 %v58
    %169 = vmatprep.subr.mxu0 0.0
    %170 = vmatpush1.msra.mxu0 %v59
    %171 = vmatprep.subr.mxu0 0.0
    %172 = vmatpush1.msra.mxu0 %v60
    %173 = vmatprep.subr.mxu0 0.0
    %174 = vmatpush1.msra.mxu0 %v61
    %175 = vmatprep.subr.mxu0 0.0
    %176 = vmatpush1.msra.mxu0 %v62
    %177 = vmatprep.mubr.f32.mxu0 %v86
    %178 = vmatmul.mubr.f32.gmra.mrb[0].mxu0 %v85
    %v179 = vpop.f32.mrb[0].mxu0
    %v180 = vadd.f32 %v111, %v179
    %v181 = vpop.f32.mrb[0].mxu0
    %182 = vmatprep.mubr.f32.mxu0 %v88
    %183 = vmatmul.mubr.f32.gmra.mrb[0].mxu0 %v87
    %v184 = vpop.f32.mrb[0].mxu0
    %v185 = vadd.f32 %v112, %v184
    %v186 = vpop.f32.mrb[0].mxu0
    %187 = vdwg.mxu0
    %v188 = vadd.f32 %v180, %v65
    %v189 = vadd.f32 %v185, %v65
    %v190 = vld [vmem:[%s5] sm:$0xff]
    %v191 = vld [vmem:[%s5 + $0x20] sm:$0xff]
    %v192 = vld [vmem:[%s5 + $0x40] sm:$0xff]
    %v193 = vld [vmem:[%s5 + $0x60] sm:$0xff]
    %v194 = vld [vmem:[%s6] sm:$0x1]
    %v196 = vlaneseq
    %v197 = vshrl.u32 %v196, 7
    %v198 = vsub.s32 0, %v197
    %v199 = vrot.slane %v194, %v198
    %vm201 = vcmask 261120
    %v203 = vsel %vm201, %v188, 0
    %v206 = vsel %vm201, %v189, 0
    %208 = vmatprep.subr.mxu0 0.0
    %209 = vmatpush1.msra.mxu0 %v190
    %210 = vmatprep.subr.mxu0 0.0
    %211 = vmatpush1.msra.mxu0 %v191
    %212 = vmatprep.subr.mxu0 0.0
    %213 = vmatpush1.msra.mxu0 %v192
    %214 = vmatprep.subr.mxu0 0.0
    %215 = vmatpush1.msra.mxu0 %v193
    %216 = vmatprep.subr.mxu0 0.0
    %217 = vmatpush1.msra.mxu0 0.0
    %218 = vmatprep.subr.mxu0 0.0
    %219 = vmatpush1.msra.mxu0 0.0
    %220 = vmatprep.subr.mxu0 0.0
    %221 = vmatpush1.msra.mxu0 0.0
    %222 = vmatprep.subr.mxu0 0.0
    %223 = vmatpush1.msra.mxu0 0.0
    %224 = vmatprep.subr.mxu0 0.0
    %225 = vmatpush1.msra.mxu0 0.0
    %226 = vmatprep.subr.mxu0 0.0
    %227 = vmatpush1.msra.mxu0 0.0
    %228 = vmatprep.subr.mxu0 0.0
    %229 = vmatpush1.msra.mxu0 0.0
    %230 = vmatprep.subr.mxu0 0.0
    %231 = vmatpush1.msra.mxu0 0.0
    %232 = vmatprep.subr.mxu0 0.0
    %233 = vmatpush1.msra.mxu0 0.0
    %234 = vmatprep.subr.mxu0 0.0
    %235 = vmatpush1.msra.mxu0 0.0
    %236 = vmatprep.subr.mxu0 0.0
    %237 = vmatpush1.msra.mxu0 0.0
    %238 = vmatprep.subr.mxu0 0.0
    %239 = vmatpush1.msra.mxu0 0.0
    %240 = vmatprep.subr.mxu0 0.0
    %241 = vmatpush1.msra.mxu0 0.0
    %242 = vmatprep.subr.mxu0 0.0
    %243 = vmatpush1.msra.mxu0 0.0
    %244 = vmatprep.subr.mxu0 0.0
    %245 = vmatpush1.msra.mxu0 0.0
    %246 = vmatprep.subr.mxu0 0.0
    %247 = vmatpush1.msra.mxu0 0.0
    %248 = vmatprep.subr.mxu0 0.0
    %249 = vmatpush1.msra.mxu0 0.0
    %250 = vmatprep.subr.mxu0 0.0
    %251 = vmatpush1.msra.mxu0 0.0
    %252 = vmatprep.subr.mxu0 0.0
    %253 = vmatpush1.msra.mxu0 0.0
    %254 = vmatprep.subr.mxu0 0.0
    %255 = vmatpush1.msra.mxu0 0.0
    %256 = vmatprep.subr.mxu0 0.0
    %257 = vmatpush1.msra.mxu0 0.0
    %258 = vmatprep.subr.mxu0 0.0
    %259 = vmatpush1.msra.mxu0 0.0
    %260 = vmatprep.subr.mxu0 0.0
    %261 = vmatpush1.msra.mxu0 0.0
    %262 = vmatprep.subr.mxu0 0.0
    %263 = vmatpush1.msra.mxu0 0.0
    %264 = vmatprep.subr.mxu0 0.0
    %265 = vmatpush1.msra.mxu0 0.0
    %266 = vmatprep.subr.mxu0 0.0
    %267 = vmatpush1.msra.mxu0 0.0
    %268 = vmatprep.subr.mxu0 0.0
    %269 = vmatpush1.msra.mxu0 0.0
    %270 = vmatprep.subr.mxu0 0.0
    %271 = vmatpush1.msra.mxu0 0.0
    %272 = vmatprep.mubr.f32.mxu0 0.0
    %273 = vmatmul.mubr.f32.gmra.mrb[0].mxu0 %v203
    %v274 = vpop.f32.mrb[0].mxu0
    %v275 = vadd.f32 %v199, %v274
    %v276 = vpop.f32.mrb[0].mxu0
    %277 = vmatprep.mubr.f32.mxu0 0.0
    %278 = vmatmul.mubr.f32.gmra.mrb[0].mxu0 %v206
    %v279 = vpop.f32.mrb[0].mxu0
    %v280 = vadd.f32 %v199, %v279
    %v281 = vpop.f32.mrb[0].mxu0
    %282 = vdwg.mxu0
    %v283 = vtanh.pop %v275
    %v284 = vtanh.pop %v280
    %v285 = vld [vmem:[%s2] sm:$0xff]
    %v286 = vld [vmem:[%s2 + $0x8] sm:$0xff]
    %v287 = vcvt.s32.f32 %v285
    %v288 = vcvt.s32.f32 %v286
    %290 = vset.pattern.permute.xlu0 0
    %291 = vperm.xlu0 %290, %v287
    %v292 = vpop.permute.xlu0 %291
    %295 = vset.pattern.permute.xlu0 0
    %296 = vperm.xlu0 %295, %v288
    %v297 = vpop.permute.xlu0 %296
    %v299 = vmul.f32 %v283, %v292
    %v300 = vmul.f32 %v284, %v297
    %301 = vst.msk [vmem:[#allocation2] sm:$0xff] %vm201, %v299
    %302 = vst.msk [vmem:[#allocation2 + $0x8] sm:$0xff] %vm201, %v300
    %v303 = vlaneseq
    %v304 = vshrl.u32 %v303, 7
    %vm305 = vcmp.ge.s32.totalorder %v304, 4
    %v306 = vsel %vm305, 8, 0
    %v307 = vld [vmem:[%s3] sm:$0xff]
    %v308 = vadd.s32 %v307, %v306
    %309 = vset.pattern.permute.xlu0 0
    %310 = vperm.xlu0 %309, %v308
    %v311 = vpop.permute.xlu0 %310
    %vm312 = vcmp.eq.s32.totalorder %v67, %v311
    %v313 = vsel %vm312, 1, 0
    %v314 = vcvt.s32.f32 %v313
    %vm315 = vcmask 130048
    %v317 = vsel %vm315, %v314, 0
    %319 = vmatprep.subr.mxu0 0.0
    %320 = vmatpush1.msra.mxu0 %v299
    %321 = vmatprep.subr.mxu0 0.0
    %322 = vmatpush1.msra.mxu0 %v300
    %323 = vmatprep.subr.mxu0 0.0
    %324 = vmatpush1.msra.mxu0 0.0
    %325 = vmatprep.subr.mxu0 0.0
    %326 = vmatpush1.msra.mxu0 0.0
    %327 = vmatprep.subr.mxu0 0.0
    %328 = vmatpush1.msra.mxu0 0.0
    %329 = vmatprep.subr.mxu0 0.0
    %330 = vmatpush1.msra.mxu0 0.0
    %331 = vmatprep.subr.mxu0 0.0
    %332 = vmatpush1.msra.mxu0 0.0
    %333 = vmatprep.subr.mxu0 0.0
    %334 = vmatpush1.msra.mxu0 0.0
    %335 = vmatprep.subr.mxu0 0.0
    %336 = vmatpush1.msra.mxu0 0.0
    %337 = vmatprep.subr.mxu0 0.0
    %338 = vmatpush1.msra.mxu0 0.0
    %339 = vmatprep.subr.mxu0 0.0
    %340 = vmatpush1.msra.mxu0 0.0
    %341 = vmatprep.subr.mxu0 0.0
    %342 = vmatpush1.msra.mxu0 0.0
    %343 = vmatprep.subr.mxu0 0.0
    %344 = vmatpush1.msra.mxu0 0.0
    %345 = vmatprep.subr.mxu0 0.0
    %346 = vmatpush1.msra.mxu0 0.0
    %347 = vmatprep.subr.mxu0 0.0
    %348 = vmatpush1.msra.mxu0 0.0
    %349 = vmatprep.subr.mxu0 0.0
    %350 = vmatpush1.msra.mxu0 0.0
    %351 = vmatprep.subr.mxu0 0.0
    %352 = vmatpush1.msra.mxu0 0.0
    %353 = vmatprep.subr.mxu0 0.0
    %354 = vmatpush1.msra.mxu0 0.0
    %355 = vmatprep.subr.mxu0 0.0
    %356 = vmatpush1.msra.mxu0 0.0
    %357 = vmatprep.subr.mxu0 0.0
    %358 = vmatpush1.msra.mxu0 0.0
    %359 = vmatprep.subr.mxu0 0.0
    %360 = vmatpush1.msra.mxu0 0.0
    %361 = vmatprep.subr.mxu0 0.0
    %362 = vmatpush1.msra.mxu0 0.0
    %363 = vmatprep.subr.mxu0 0.0
    %364 = vmatpush1.msra.mxu0 0.0
    %365 = vmatprep.subr.mxu0 0.0
    %366 = vmatpush1.msra.mxu0 0.0
    %367 = vmatprep.subr.mxu0 0.0
    %368 = vmatpush1.msra.mxu0 0.0
    %369 = vmatprep.subr.mxu0 0.0
    %370 = vmatpush1.msra.mxu0 0.0
    %371 = vmatprep.subr.mxu0 0.0
    %372 = vmatpush1.msra.mxu0 0.0
    %373 = vmatprep.subr.mxu0 0.0
    %374 = vmatpush1.msra.mxu0 0.0
    %375 = vmatprep.subr.mxu0 0.0
    %376 = vmatpush1.msra.mxu0 0.0
    %377 = vmatprep.subr.mxu0 0.0
    %378 = vmatpush1.msra.mxu0 0.0
    %379 = vmatprep.subr.mxu0 0.0
    %380 = vmatpush1.msra.mxu0 0.0
    %381 = vmatprep.subr.mxu0 0.0
    %382 = vmatpush1.msra.mxu0 0.0
    %383 = vmatprep.mubr.f32.mxu0 0.0
    %384 = vmatmul.mubr.f32.gmra.mrb[0].mxu0 %v317
    %v385 = vpop.f32.mrb[0].mxu0
    %v386 = vadd.f32 0.0, %v385
    %v387 = vpop.f32.mrb[0].mxu0
    %388 = vdwg.mxu0
    %v389 = vld [vmem:[%s5 + $0x8] sm:$0xff]
    %v390 = vld [vmem:[%s5 + $0x10] sm:$0xff]
    %v391 = vld [vmem:[%s5 + $0x18] sm:$0xff]
    %v392 = vld [vmem:[%s5 + $0x28] sm:$0xff]
    %v393 = vld [vmem:[%s5 + $0x30] sm:$0xff]
    %v394 = vld [vmem:[%s5 + $0x38] sm:$0xff]
    %v395 = vld [vmem:[%s5 + $0x48] sm:$0xff]
    %v396 = vld [vmem:[%s5 + $0x50] sm:$0xff]
    %v397 = vld [vmem:[%s5 + $0x58] sm:$0xff]
    %v398 = vld [vmem:[%s5 + $0x68] sm:$0xff]
    %v399 = vld [vmem:[%s5 + $0x70] sm:$0xff]
    %v400 = vld [vmem:[%s5 + $0x78] sm:$0xff]
    %v401 = vld [vmem:[%s6 + $0x1] sm:$0x7]
    %v403 = vlaneseq
    %v404 = vshrl.u32 %v403, 7
    %v405 = vsub.s32 0, %v404
    %v406 = vrot.slane %v401, %v405
    %v407 = vlaneseq
    %v408 = vshrl.u32 %v407, 7
    %v409 = vsub.s32 1, %v408
    %v410 = vrot.slane %v401, %v409
    %v411 = vlaneseq
    %v412 = vshrl.u32 %v411, 7
    %v413 = vsub.s32 2, %v412
    %v414 = vrot.slane %v401, %v413
    %427 = vrot.lane.b32.xlu0 %v389, 64
    %v428 = vpop.permute.xlu0 %427
    %429 = vrot.lane.b32.xlu0 %v390, 64
    %v430 = vpop.permute.xlu0 %429
    %431 = vrot.lane.b32.xlu0 %v391, 64
    %v432 = vpop.permute.xlu0 %431
    %433 = vrot.lane.b32.xlu0 %v392, 64
    %v434 = vpop.permute.xlu0 %433
    %435 = vrot.lane.b32.xlu0 %v393, 64
    %v436 = vpop.permute.xlu0 %435
    %437 = vrot.lane.b32.xlu0 %v394, 64
    %v438 = vpop.permute.xlu0 %437
    %439 = vrot.lane.b32.xlu0 %v395, 64
    %v440 = vpop.permute.xlu0 %439
    %441 = vrot.lane.b32.xlu0 %v396, 64
    %v442 = vpop.permute.xlu0 %441
    %443 = vrot.lane.b32.xlu0 %v397, 64
    %v444 = vpop.permute.xlu0 %443
    %445 = vrot.lane.b32.xlu0 %v398, 64
    %v446 = vpop.permute.xlu0 %445
    %447 = vrot.lane.b32.xlu0 %v399, 64
    %v448 = vpop.permute.xlu0 %447
    %449 = vrot.lane.b32.xlu0 %v400, 64
    %v450 = vpop.permute.xlu0 %449
    %vm451 = vcmask 523264
    %v452 = vsel %vm451, %v428, %v430
    %v453 = vsel %vm451, %v430, %v432
    %v454 = vsel %vm451, %v434, %v436
    %v455 = vsel %vm451, %v436, %v438
    %v456 = vsel %vm451, %v440, %v442
    %v457 = vsel %vm451, %v442, %v444
    %v458 = vsel %vm451, %v446, %v448
    %v459 = vsel %vm451, %v448, %v450
    %468 = vrot.lane.b32.xlu0 %v406, 64
    %v469 = vpop.permute.xlu0 %468
    %470 = vrot.lane.b32.xlu0 %v410, 64
    %v471 = vpop.permute.xlu0 %470
    %472 = vrot.lane.b32.xlu0 %v414, 64
    %v473 = vpop.permute.xlu0 %472
    %v474 = vsel %vm451, %v469, %v471
    %v475 = vsel %vm451, %v471, %v473
    %v479 = vsel %vm201, %v386, 0
    %481 = vmatprep.subr.mxu0 %v453
    %482 = vmatpush1.msra.mxu0 %v452
    %483 = vmatprep.subr.mxu0 %v455
    %484 = vmatpush1.msra.mxu0 %v454
    %485 = vmatprep.subr.mxu0 %v457
    %486 = vmatpush1.msra.mxu0 %v456
    %487 = vmatprep.subr.mxu0 %v459
    %488 = vmatpush1.msra.mxu0 %v458
    %489 = vmatprep.subr.mxu0 0.0
    %490 = vmatpush1.msra.mxu0 0.0
    %491 = vmatprep.subr.mxu0 0.0
    %492 = vmatpush1.msra.mxu0 0.0
    %493 = vmatprep.subr.mxu0 0.0
    %494 = vmatpush1.msra.mxu0 0.0
    %495 = vmatprep.subr.mxu0 0.0
    %496 = vmatpush1.msra.mxu0 0.0
    %497 = vmatprep.subr.mxu0 0.0
    %498 = vmatpush1.msra.mxu0 0.0
    %499 = vmatprep.subr.mxu0 0.0
    %500 = vmatpush1.msra.mxu0 0.0
    %501 = vmatprep.subr.mxu0 0.0
    %502 = vmatpush1.msra.mxu0 0.0
    %503 = vmatprep.subr.mxu0 0.0
    %504 = vmatpush1.msra.mxu0 0.0
    %505 = vmatprep.subr.mxu0 0.0
    %506 = vmatpush1.msra.mxu0 0.0
    %507 = vmatprep.subr.mxu0 0.0
    %508 = vmatpush1.msra.mxu0 0.0
    %509 = vmatprep.subr.mxu0 0.0
    %510 = vmatpush1.msra.mxu0 0.0
    %511 = vmatprep.subr.mxu0 0.0
    %512 = vmatpush1.msra.mxu0 0.0
    %513 = vmatprep.subr.mxu0 0.0
    %514 = vmatpush1.msra.mxu0 0.0
    %515 = vmatprep.subr.mxu0 0.0
    %516 = vmatpush1.msra.mxu0 0.0
    %517 = vmatprep.subr.mxu0 0.0
    %518 = vmatpush1.msra.mxu0 0.0
    %519 = vmatprep.subr.mxu0 0.0
    %520 = vmatpush1.msra.mxu0 0.0
    %521 = vmatprep.subr.mxu0 0.0
    %522 = vmatpush1.msra.mxu0 0.0
    %523 = vmatprep.subr.mxu0 0.0
    %524 = vmatpush1.msra.mxu0 0.0
    %525 = vmatprep.subr.mxu0 0.0
    %526 = vmatpush1.msra.mxu0 0.0
    %527 = vmatprep.subr.mxu0 0.0
    %528 = vmatpush1.msra.mxu0 0.0
    %529 = vmatprep.subr.mxu0 0.0
    %530 = vmatpush1.msra.mxu0 0.0
    %531 = vmatprep.subr.mxu0 0.0
    %532 = vmatpush1.msra.mxu0 0.0
    %533 = vmatprep.subr.mxu0 0.0
    %534 = vmatpush1.msra.mxu0 0.0
    %535 = vmatprep.subr.mxu0 0.0
    %536 = vmatpush1.msra.mxu0 0.0
    %537 = vmatprep.subr.mxu0 0.0
    %538 = vmatpush1.msra.mxu0 0.0
    %539 = vmatprep.subr.mxu0 0.0
    %540 = vmatpush1.msra.mxu0 0.0
    %541 = vmatprep.subr.mxu0 0.0
    %542 = vmatpush1.msra.mxu0 0.0
    %543 = vmatprep.subr.mxu0 0.0
    %544 = vmatpush1.msra.mxu0 0.0
    %545 = vmatprep.mubr.f32.mxu0 0.0
    %546 = vmatmul.mubr.f32.gmra.mrb[0].mxu0 %v479
    %v547 = vpop.f32.mrb[0].mxu0
    %v548 = vadd.f32 %v474, %v547
    %v549 = vpop.f32.mrb[0].mxu0
    %v550 = vadd.f32 %v475, %v549
    %551 = vdwg.mxu0
    %552 = vst [vmem:[#allocation4] sm:$0xff] %v548
    %553 = vst [vmem:[#allocation4 + $0x8] sm:$0xff] %v550
    %v555 = vrot.slane %v300, 7
    %vm557 = vcmask 1040384
    %v558 = vsel %vm557, %v299, %v555
    %v559 = vld [vmem:[%s5] sm:$0xff]
    %v560 = vld [vmem:[%s5 + $0x20] sm:$0xff]
    %v561 = vld [vmem:[%s5 + $0x40] sm:$0xff]
    %v562 = vld [vmem:[%s5 + $0x60] sm:$0xff]
    %v563 = vld [vmem:[%s6] sm:$0x1]
    %v565 = vlaneseq
    %v566 = vshrl.u32 %v565, 7
    %v567 = vsub.s32 0, %v566
    %v568 = vrot.slane %v563, %v567
    %573 = vrot.lane.b32.xlu0 %v559, 96
    %v574 = vpop.permute.xlu0 %573
    %575 = vrot.lane.b32.xlu0 %v560, 96
    %v576 = vpop.permute.xlu0 %575
    %577 = vrot.lane.b32.xlu0 %v561, 96
    %v578 = vpop.permute.xlu0 %577
    %579 = vrot.lane.b32.xlu0 %v562, 96
    %v580 = vpop.permute.xlu0 %579
    %585 = vrot.lane.b32.xlu0 %v568, 96
    %v586 = vpop.permute.xlu0 %585
    %v589 = vsel %vm201, %v558, 0
    %591 = vmatprep.subr.mxu0 0.0
    %592 = vmatpush1.msra.mxu0 %v574
    %593 = vmatprep.subr.mxu0 0.0
    %594 = vmatpush1.msra.mxu0 %v576
    %595 = vmatprep.subr.mxu0 0.0
    %596 = vmatpush1.msra.mxu0 %v578
    %597 = vmatprep.subr.mxu0 0.0
    %598 = vmatpush1.msra.mxu0 %v580
    %599 = vmatprep.subr.mxu0 0.0
    %600 = vmatpush1.msra.mxu0 0.0
    %601 = vmatprep.subr.mxu0 0.0
    %602 = vmatpush1.msra.mxu0 0.0
    %603 = vmatprep.subr.mxu0 0.0
    %604 = vmatpush1.msra.mxu0 0.0
    %605 = vmatprep.subr.mxu0 0.0
    %606 = vmatpush1.msra.mxu0 0.0
    %607 = vmatprep.subr.mxu0 0.0
    %608 = vmatpush1.msra.mxu0 0.0
    %609 = vmatprep.subr.mxu0 0.0
    %610 = vmatpush1.msra.mxu0 0.0
    %611 = vmatprep.subr.mxu0 0.0
    %612 = vmatpush1.msra.mxu0 0.0
    %613 = vmatprep.subr.mxu0 0.0
    %614 = vmatpush1.msra.mxu0 0.0
    %615 = vmatprep.subr.mxu0 0.0
    %616 = vmatpush1.msra.mxu0 0.0
    %617 = vmatprep.subr.mxu0 0.0
    %618 = vmatpush1.msra.mxu0 0.0
    %619 = vmatprep.subr.mxu0 0.0
    %620 = vmatpush1.msra.mxu0 0.0
    %621 = vmatprep.subr.mxu0 0.0
    %622 = vmatpush1.msra.mxu0 0.0
    %623 = vmatprep.subr.mxu0 0.0
    %624 = vmatpush1.msra.mxu0 0.0
    %625 = vmatprep.subr.mxu0 0.0
    %626 = vmatpush1.msra.mxu0 0.0
    %627 = vmatprep.subr.mxu0 0.0
    %628 = vmatpush1.msra.mxu0 0.0
    %629 = vmatprep.subr.mxu0 0.0
    %630 = vmatpush1.msra.mxu0 0.0
    %631 = vmatprep.subr.mxu0 0.0
    %632 = vmatpush1.msra.mxu0 0.0
    %633 = vmatprep.subr.mxu0 0.0
    %634 = vmatpush1.msra.mxu0 0.0
    %635 = vmatprep.subr.mxu0 0.0
    %636 = vmatpush1.msra.mxu0 0.0
    %637 = vmatprep.subr.mxu0 0.0
    %638 = vmatpush1.msra.mxu0 0.0
    %639 = vmatprep.subr.mxu0 0.0
    %640 = vmatpush1.msra.mxu0 0.0
    %641 = vmatprep.subr.mxu0 0.0
    %642 = vmatpush1.msra.mxu0 0.0
    %643 = vmatprep.subr.mxu0 0.0
    %644 = vmatpush1.msra.mxu0 0.0
    %645 = vmatprep.subr.mxu0 0.0
    %646 = vmatpush1.msra.mxu0 0.0
    %647 = vmatprep.subr.mxu0 0.0
    %648 = vmatpush1.msra.mxu0 0.0
    %649 = vmatprep.subr.mxu0 0.0
    %650 = vmatpush1.msra.mxu0 0.0
    %651 = vmatprep.subr.mxu0 0.0
    %652 = vmatpush1.msra.mxu0 0.0
    %653 = vmatprep.subr.mxu0 0.0
    %654 = vmatpush1.msra.mxu0 0.0
    %655 = vmatprep.mubr.f32.mxu0 0.0
    %656 = vmatmul.mubr.f32.gmra.mrb[0].mxu0 %v589
    %v657 = vpop.f32.mrb[0].mxu0
    %v658 = vadd.f32 %v586, %v657
    %v659 = vpop.f32.mrb[0].mxu0
    %660 = vdwg.mxu0
    %v661 = vtanh.pop %v658
    %v662 = vld [vmem:[%s5] sm:$0xff]
    %v663 = vld [vmem:[%s5 + $0x8] sm:$0xff]
    %v664 = vld [vmem:[%s5 + $0x20] sm:$0xff]
    %v665 = vld [vmem:[%s5 + $0x28] sm:$0xff]
    %v666 = vld [vmem:[%s5 + $0x40] sm:$0xff]
    %v667 = vld [vmem:[%s5 + $0x48] sm:$0xff]
    %v668 = vld [vmem:[%s5 + $0x60] sm:$0xff]
    %v669 = vld [vmem:[%s5 + $0x68] sm:$0xff]
    %v670 = vld [vmem:[%s6] sm:$0x3]
    %v672 = vlaneseq
    %v673 = vshrl.u32 %v672, 7
    %v674 = vsub.s32 0, %v673
    %v675 = vrot.slane %v670, %v674
    %v676 = vlaneseq
    %v677 = vshrl.u32 %v676, 7
    %v678 = vsub.s32 1, %v677
    %v679 = vrot.slane %v670, %v678
    %688 = vrot.lane.b32.xlu0 %v662, 64
    %v689 = vpop.permute.xlu0 %688
    %690 = vrot.lane.b32.xlu0 %v663, 64
    %v691 = vpop.permute.xlu0 %690
    %692 = vrot.lane.b32.xlu0 %v664, 64
    %v693 = vpop.permute.xlu0 %692
    %694 = vrot.lane.b32.xlu0 %v665, 64
    %v695 = vpop.permute.xlu0 %694
    %696 = vrot.lane.b32.xlu0 %v666, 64
    %v697 = vpop.permute.xlu0 %696
    %698 = vrot.lane.b32.xlu0 %v667, 64
    %v699 = vpop.permute.xlu0 %698
    %700 = vrot.lane.b32.xlu0 %v668, 64
    %v701 = vpop.permute.xlu0 %700
    %702 = vrot.lane.b32.xlu0 %v669, 64
    %v703 = vpop.permute.xlu0 %702
    %v704 = vsel %vm451, %v689, %v691
    %v705 = vsel %vm451, %v693, %v695
    %v706 = vsel %vm451, %v697, %v699
    %v707 = vsel %vm451, %v701, %v703
    %712 = vrot.lane.b32.xlu0 %v675, 64
    %v713 = vpop.permute.xlu0 %712
    %714 = vrot.lane.b32.xlu0 %v679, 64
    %v715 = vpop.permute.xlu0 %714
    %v716 = vsel %vm451, %v713, %v715
    %v719 = vsel %vm201, %v661, 0
    %721 = vmatprep.subr.mxu0 0.0
    %722 = vmatpush1.msra.mxu0 %v704
    %723 = vmatprep.subr.mxu0 0.0
    %724 = vmatpush1.msra.mxu0 %v705
    %725 = vmatprep.subr.mxu0 0.0
    %726 = vmatpush1.msra.mxu0 %v706
    %727 = vmatprep.subr.mxu0 0.0
    %728 = vmatpush1.msra.mxu0 %v707
    %729 = vmatprep.subr.mxu0 0.0
    %730 = vmatpush1.msra.mxu0 0.0
    %731 = vmatprep.subr.mxu0 0.0
    %732 = vmatpush1.msra.mxu0 0.0
    %733 = vmatprep.subr.mxu0 0.0
    %734 = vmatpush1.msra.mxu0 0.0
    %735 = vmatprep.subr.mxu0 0.0
    %736 = vmatpush1.msra.mxu0 0.0
    %737 = vmatprep.subr.mxu0 0.0
    %738 = vmatpush1.msra.mxu0 0.0
    %739 = vmatprep.subr.mxu0 0.0
    %740 = vmatpush1.msra.mxu0 0.0
    %741 = vmatprep.subr.mxu0 0.0
    %742 = vmatpush1.msra.mxu0 0.0
    %743 = vmatprep.subr.mxu0 0.0
    %744 = vmatpush1.msra.mxu0 0.0
    %745 = vmatprep.subr.mxu0 0.0
    %746 = vmatpush1.msra.mxu0 0.0
    %747 = vmatprep.subr.mxu0 0.0
    %748 = vmatpush1.msra.mxu0 0.0
    %749 = vmatprep.subr.mxu0 0.0
    %750 = vmatpush1.msra.mxu0 0.0
    %751 = vmatprep.subr.mxu0 0.0
    %752 = vmatpush1.msra.mxu0 0.0
    %753 = vmatprep.subr.mxu0 0.0
    %754 = vmatpush1.msra.mxu0 0.0
    %755 = vmatprep.subr.mxu0 0.0
    %756 = vmatpush1.msra.mxu0 0.0
    %757 = vmatprep.subr.mxu0 0.0
    %758 = vmatpush1.msra.mxu0 0.0
    %759 = vmatprep.subr.mxu0 0.0
    %760 = vmatpush1.msra.mxu0 0.0
    %761 = vmatprep.subr.mxu0 0.0
    %762 = vmatpush1.msra.mxu0 0.0
    %763 = vmatprep.subr.mxu0 0.0
    %764 = vmatpush1.msra.mxu0 0.0
    %765 = vmatprep.subr.mxu0 0.0
    %766 = vmatpush1.msra.mxu0 0.0
    %767 = vmatprep.subr.mxu0 0.0
    %768 = vmatpush1.msra.mxu0 0.0
    %769 = vmatprep.subr.mxu0 0.0
    %770 = vmatpush1.msra.mxu0 0.0
    %771 = vmatprep.subr.mxu0 0.0
    %772 = vmatpush1.msra.mxu0 0.0
    %773 = vmatprep.subr.mxu0 0.0
    %774 = vmatpush1.msra.mxu0 0.0
    %775 = vmatprep.subr.mxu0 0.0
    %776 = vmatpush1.msra.mxu0 0.0
    %777 = vmatprep.subr.mxu0 0.0
    %778 = vmatpush1.msra.mxu0 0.0
    %779 = vmatprep.subr.mxu0 0.0
    %780 = vmatpush1.msra.mxu0 0.0
    %781 = vmatprep.subr.mxu0 0.0
    %782 = vmatpush1.msra.mxu0 0.0
    %783 = vmatprep.subr.mxu0 0.0
    %784 = vmatpush1.msra.mxu0 0.0
    %785 = vmatprep.mubr.f32.mxu0 0.0
    %786 = vmatmul.mubr.f32.gmra.mrb[0].mxu0 %v719
    %v787 = vpop.f32.mrb[0].mxu0
    %v788 = vadd.f32 %v716, %v787
    %v789 = vpop.f32.mrb[0].mxu0
    %790 = vdwg.mxu0
    %791 = vst [vmem:[#allocation6] sm:$0x3] %v788
    // Predicated region
    $region30: #{_forward.1} parent=1 // pred_check
      _
    $region31: #{_forward.1} parent=1 // pred_check_branch
      %793 = sbr.rel (0) target = $region33
    $region32: #{_forward.1} parent=1 // pred_region
      %s795 = ssub.s32 256, 256
      %796 = vsyncadd [#allocation3], %s795
      %s797 = sshll.u32 [#allocation2], 4
      %s798 = int_to_ptr.vmem [resolvable:$true] %s797
      %803 = dma.vmem_to_hbm [thread:$0]  %s798, 256, %s7, [#allocation3], 128, 128, 8
    $region33: #{_forward.1} parent=1 // pred_fallthru
      _
    // Predicated region
    $region34: #{_forward.1} parent=1 // pred_check
      _
    $region35: #{_forward.1} parent=1 // pred_check_branch
      %805 = sbr.rel (0) target = $region37
    $region36: #{_forward.1} parent=1 // pred_region
      %s807 = ssub.s32 256, 256
      %808 = vsyncadd [#allocation5], %s807
      %s810 = sshll.u32 [#allocation4], 4
      %s811 = int_to_ptr.vmem [resolvable:$true] %s810
      %813 = dma.vmem_to_hbm [thread:$0]  %s811, 256, %s8, [#allocation5]
    $region37: #{_forward.1} parent=1 // pred_fallthru
      _
    // Predicated region
    $region38: #{_forward.1} parent=1 // pred_check
      _
    $region39: #{_forward.1} parent=1 // pred_check_branch
      %815 = sbr.rel (0) target = $region41
    $region40: #{_forward.1} parent=1 // pred_region
      %s817 = ssub.s32 32, 32
      %818 = vsyncadd [#allocation5], %s817
      %s820 = sshll.u32 [#allocation6], 4
      %s821 = int_to_ptr.vmem [resolvable:$true] %s820
      %823 = dma.vmem_to_hbm [thread:$0]  %s821, 32, %s9, [#allocation5]
    $region41: #{_forward.1} parent=1 // pred_fallthru
      _
    // Predicated region
    $region42: #{_forward.1} parent=1 // pred_check
      _
    $region43: #{_forward.1} parent=1 // pred_check_branch
      %825 = sbr.rel (0) target = $region45
    $region44: #{_forward.1} parent=1 // pred_region
      %826 = dma.done [#allocation3], 256
    $region45: #{_forward.1} parent=1 // pred_fallthru
      _
    // Predicated region
    $region46: #{_forward.1} parent=1 // pred_check
      _
    $region47: #{_forward.1} parent=1 // pred_check_branch
      %828 = sbr.rel (0) target = $region49
    $region48: #{_forward.1} parent=1 // pred_region
      %829 = dma.done [#allocation5], 256
    $region49: #{_forward.1} parent=1 // pred_fallthru
      _
    // Predicated region
    $region50: #{_forward.1} parent=1 // pred_check
      _
    $region51: #{_forward.1} parent=1 // pred_check_branch
      %831 = sbr.rel (0) target = $region53
    $region52: #{_forward.1} parent=1 // pred_region
      %832 = dma.done [#allocation5], 32
    $region53: #{_forward.1} parent=1 // pred_fallthru
      _
    %833 = vsyncpa [#allocation3], 1
    %834 = vsyncpa [#allocation5], 1

</llo_original>
